<compile_context>
chip_gen: v6e
topology: v6e:2x2x1
jax: 0.10.0
libtpu: 0.0.40
codegen_flags: <defaults>
</compile_context>

<pallas_src>
import jax
import jax.numpy as jnp
from jax.experimental import pallas as pl
from jax.experimental.pallas import tpu as pltpu

EPS = 1e-5
HIDDEN = 512


def fcn_head_kernel(x_ref, w1_ref, b1_ref, w2_ref, b2_ref, o_ref, acc_ref):
    """Grid = (batch tiles, K tiles).  K is a reduction into acc_ref; the
    bias/ReLU epilogue and the 512->1 output layer (VPU mul + lane reduce)
    run only at the last K step."""
    k = pl.program_id(1)

    @pl.when(k == 0)
    def _():
        acc_ref[...] = jnp.zeros_like(acc_ref)

    # Linear1 partial product on this K tile (BN1 already folded into w1/b1).
    acc_ref[...] += jnp.dot(x_ref[...], w1_ref[...],
                            preferred_element_type=jnp.float32)

    @pl.when(k == pl.num_programs(1) - 1)
    def _():
        h = jnp.maximum(acc_ref[...] + b1_ref[...], 0.0)          # bias + ReLU
        # Linear2 (BN2 folded): 512 -> 1 as VPU multiply + XLU lane reduction.
        out = jnp.sum(h * w2_ref[...], axis=-1, keepdims=True) + b2_ref[...]
        o_ref[...] = out.astype(o_ref.dtype)


def _fold_batchnorms(params):
    """Fold eval-mode BN1 into Linear1 and BN2 into Linear2 (exact)."""
    (g1, b1, m1, v1, w1, bias1, g2, b2, m2, v2, w2, bias2) = params
    # BN(x) = x*a + c  with  a = gamma*rsqrt(var+eps),  c = beta - mean*a
    a1 = g1 * jax.lax.rsqrt(v1 + EPS)                   # (1, in_f)
    c1 = b1 - m1 * a1
    a2 = g2 * jax.lax.rsqrt(v2 + EPS)                   # (1, hidden)
    c2 = b2 - m2 * a2
    # Linear1(BN1(x)) = x @ (diag(a1) w1) + (c1 @ w1 + bias1)
    w1f = w1 * a1.reshape(-1, 1)                        # (in_f, hidden)
    b1f = c1 @ w1 + bias1                               # (1, hidden)
    # Linear2(BN2(h)) = h @ (diag(a2) w2) + (c2 @ w2 + bias2)
    w2f = w2 * a2.reshape(-1, 1)                        # (hidden, 1)
    b2f = c2 @ w2 + bias2                               # (1, 1)
    return w1f, b1f, w2f, b2f


def fcn_forward(x_nchw, params, *, tb=16, tk=512, use_bf16=False):
    """x_nchw: (B, C, H, W).  base == identity, then Head(in_f, 1)."""
    B = x_nchw.shape[0]
    x = x_nchw.reshape(B, -1).astype(jnp.float32)       # nn.Flatten()
    in_f = x.shape[1]

    w1f, b1f, w2f, b2f = _fold_batchnorms(params)
    w2_row = w2f.reshape(1, HIDDEN)                     # lane-dense (1, 512)
    b2f = b2f.reshape(1, 1)

    # Pad batch to the tile grain (sublane friendly for f32 and bf16) and K to
    # the TK grain; zero-padded rows/cols contribute nothing and are sliced off.
    bp = pl.cdiv(B, tb) * tb
    kp = pl.cdiv(in_f, tk) * tk
    if bp != B or kp != in_f:
        x = jnp.pad(x, ((0, bp - B), (0, kp - in_f)))
    if kp != in_f:
        w1f = jnp.pad(w1f, ((0, kp - in_f), (0, 0)))

    if use_bf16:
        # v6e / v7x: native bf16 MXU rate + half the x/w1 DMA traffic.
        # f32 accumulation is preserved inside the kernel.
        x = x.astype(jnp.bfloat16)
        w1f = w1f.astype(jnp.bfloat16)

    grid = (bp // tb, kp // tk)
    cost = pl.CostEstimate(
        flops=2 * bp * kp * HIDDEN + 3 * bp * HIDDEN,
        transcendentals=0,
        bytes_accessed=(x.size * x.dtype.itemsize
                        + grid[0] * w1f.size * w1f.dtype.itemsize
                        + b1f.size * 4 + w2_row.size * 4 + b2f.size * 4
                        + bp * 4),
    )

    out = pl.pallas_call(
        fcn_head_kernel,
        out_shape=jax.ShapeDtypeStruct((bp, 1), jnp.float32),
        grid_spec=pltpu.PrefetchScalarGridSpec(
            num_scalar_prefetch=0,
            grid=grid,
            in_specs=[
                pl.BlockSpec((tb, tk), lambda i, k: (i, k)),       # x tile
                pl.BlockSpec((tk, HIDDEN), lambda i, k: (k, 0)),   # folded w1
                pl.BlockSpec((1, HIDDEN), lambda i, k: (0, 0)),    # folded bias1
                pl.BlockSpec((1, HIDDEN), lambda i, k: (0, 0)),    # folded w2 row
                pl.BlockSpec((1, 1), lambda i, k: (0, 0)),         # folded bias2
            ],
            out_specs=pl.BlockSpec((tb, 1), lambda i, k: (i, 0)),
            scratch_shapes=[pltpu.VMEM((tb, HIDDEN), jnp.float32)],
        ),
        compiler_params=pltpu.CompilerParams(
            dimension_semantics=("parallel", "arbitrary")),
        cost_estimate=cost,
    )(x, w1f, b1f, w2_row, b2f)

    return out[:B]


def init_params(key, in_f, hidden=HIDDEN, out_f=1):
    k1, k2, k3, k4 = jax.random.split(key, 4)
    # Linear weights stored as (in, out) so the kernel computes x @ W.
    lim1 = 1.0 / jnp.sqrt(in_f)
    w1 = jax.random.uniform(k1, (in_f, hidden), jnp.float32, -lim1, lim1)
    bias1 = jax.random.uniform(k2, (1, hidden), jnp.float32, -lim1, lim1)
    lim2 = 1.0 / jnp.sqrt(hidden)
    w2 = jax.random.uniform(k3, (hidden, out_f), jnp.float32, -lim2, lim2)
    bias2 = jax.random.uniform(k4, (1, out_f), jnp.float32, -lim2, lim2)
    # BatchNorm1d default init: gamma=1, beta=0, running_mean=0, running_var=1
    g1 = jnp.ones((1, in_f), jnp.float32)
    b1 = jnp.zeros((1, in_f), jnp.float32)
    m1 = jnp.zeros((1, in_f), jnp.float32)
    v1 = jnp.ones((1, in_f), jnp.float32)
    g2 = jnp.ones((1, hidden), jnp.float32)
    b2 = jnp.zeros((1, hidden), jnp.float32)
    m2 = jnp.zeros((1, hidden), jnp.float32)
    v2 = jnp.ones((1, hidden), jnp.float32)
    return (g1, b1, m1, v1, w1, bias1, g2, b2, m2, v2, w2, bias2)


def reference_forward(x_nchw, params):
    """Pure-JAX reference of the same eval-mode forward (un-folded math)."""
    (g1, b1, m1, v1, w1, bias1, g2, b2, m2, v2, w2, bias2) = params
    x = x_nchw.reshape(x_nchw.shape[0], -1)
    x = (x - m1) / jnp.sqrt(v1 + EPS) * g1 + b1
    x = jnp.maximum(x @ w1 + bias1, 0.0)
    x = (x - m2) / jnp.sqrt(v2 + EPS) * g2 + b2
    return x @ w2 + bias2


if __name__ == "__main__":
    key = jax.random.PRNGKey(0)
    kx, kp = jax.random.split(key)

    B, C, H, W = 2, 4, 16, 16                 # in_f = C*H*W = 1024
    x = jax.random.normal(kx, (B, C, H, W), jnp.float32)
    params = init_params(kp, in_f=C * H * W)

    ref = reference_forward(x, params)

    # f32 path (exact BN folding; tight tolerance).
    out_f32 = jax.block_until_ready(fcn_forward(x, params, use_bf16=False))
    assert out_f32.shape == (B, 1), out_f32.shape
    assert jnp.allclose(out_f32, ref, atol=1e-4, rtol=1e-4), (
        "f32 kernel mismatch", out_f32, ref)

    # bf16 MXU path (recommended on v6e/v7x; expected precision loss).
    out_bf16 = jax.block_until_ready(fcn_forward(x, params, use_bf16=True))
    assert out_bf16.shape == (B, 1), out_bf16.shape
    assert jnp.allclose(out_bf16, ref, atol=1e-1, rtol=1e-1), (
        "bf16 kernel mismatch", out_bf16, ref)

    print("KERNEL_OK")
</pallas_src>

<mosaic_0001>
module attributes {stable_mosaic.version = 11 : i64} {
  func.func @fcn_head_kernel(%arg0: i32, %arg1: i32, %arg2: memref<16x512xf32, #tpu.memory_space<vmem>>, %arg3: memref<512x512xf32, #tpu.memory_space<vmem>>, %arg4: memref<1x512xf32, #tpu.memory_space<vmem>>, %arg5: memref<1x512xf32, #tpu.memory_space<vmem>>, %arg6: memref<1x1xf32, #tpu.memory_space<vmem>>, %arg7: memref<16x1xf32, #tpu.memory_space<vmem>>, %arg8: memref<16x512xf32, #tpu.memory_space<vmem>>) attributes {dimension_semantics = [#tpu.dimension_semantics<parallel>, #tpu.dimension_semantics<arbitrary>], iteration_bounds = array<i64: 1, 2>, scalar_prefetch = 0 : i64, scratch_operands = 1 : i64, tpu.core_type = #tpu.core_type<tc>, window_params = [{transform_indices = @transform_0, window_bounds = array<i64: 16, 512>}, {transform_indices = @transform_1, window_bounds = array<i64: 512, 512>}, {pipeline_mode = #tpu.pipeline_mode<synchronous>, transform_indices = @transform_2, window_bounds = array<i64: 1, 512>}, {pipeline_mode = #tpu.pipeline_mode<synchronous>, transform_indices = @transform_3, window_bounds = array<i64: 1, 512>}, {pipeline_mode = #tpu.pipeline_mode<synchronous>, transform_indices = @transform_4, window_bounds = array<i64: 1, 1>}, {transform_indices = @transform_5, window_bounds = array<i64: 16, 1>}]} {
    %c0_i32 = arith.constant 0 : i32
    %0 = arith.cmpi eq, %arg1, %c0_i32 : i32
    %1 = arith.extui %0 : i1 to i32
    %c0_i32_0 = arith.constant 0 : i32
    %2 = arith.cmpi ne, %1, %c0_i32_0 : i32
    scf.if %2 {
      %cst_9 = arith.constant 0.000000e+00 : f32
      %12 = vector.broadcast %cst_9 : f32 to vector<16x512xf32>
      %c0_10 = arith.constant 0 : index
      %c0_11 = arith.constant 0 : index
      %13 = vector.load %arg8[%c0_10, %c0_11] : memref<16x512xf32, #tpu.memory_space<vmem>>, vector<16x512xf32>
      tpu.vector_store %arg8[%c0_10, %c0_11], %12 {strides = array<i32>} : memref<16x512xf32, #tpu.memory_space<vmem>>, vector<16x512xf32>,
    } else {
    }
    %c0 = arith.constant 0 : index
    %c0_1 = arith.constant 0 : index
    %3 = vector.load %arg8[%c0, %c0_1] : memref<16x512xf32, #tpu.memory_space<vmem>>, vector<16x512xf32>
    %c0_2 = arith.constant 0 : index
    %c0_3 = arith.constant 0 : index
    %4 = vector.load %arg2[%c0_2, %c0_3] : memref<16x512xf32, #tpu.memory_space<vmem>>, vector<16x512xf32>
    %c0_4 = arith.constant 0 : index
    %c0_5 = arith.constant 0 : index
    %5 = vector.load %arg3[%c0_4, %c0_5] : memref<512x512xf32, #tpu.memory_space<vmem>>, vector<512x512xf32>
    %cst = arith.constant dense<0.000000e+00> : vector<16x512xf32>
    %6 = tpu.matmul %4, %5, %cst {dimension_numbers = #tpu.dot_dimension_numbers<[1], [0], [0], [1], [0, 0, 1, 1], [], []>} : vector<16x512xf32>, vector<512x512xf32>, vector<16x512xf32> -> vector<16x512xf32>
    %7 = arith.addf %3, %6 : vector<16x512xf32>
    %c0_6 = arith.constant 0 : index
    %c0_7 = arith.constant 0 : index
    %8 = vector.load %arg8[%c0_6, %c0_7] : memref<16x512xf32, #tpu.memory_space<vmem>>, vector<16x512xf32>
    tpu.vector_store %arg8[%c0_6, %c0_7], %7 {strides = array<i32>} : memref<16x512xf32, #tpu.memory_space<vmem>>, vector<16x512xf32>,
    %c1_i32 = arith.constant 1 : i32
    %9 = arith.cmpi eq, %arg1, %c1_i32 : i32
    %10 = arith.extui %9 : i1 to i32
    %c0_i32_8 = arith.constant 0 : i32
    %11 = arith.cmpi ne, %10, %c0_i32_8 : i32
    scf.if %11 {
      %c0_9 = arith.constant 0 : index
      %c0_10 = arith.constant 0 : index
      %12 = vector.load %arg8[%c0_9, %c0_10] : memref<16x512xf32, #tpu.memory_space<vmem>>, vector<16x512xf32>
      %c0_11 = arith.constant 0 : index
      %c0_12 = arith.constant 0 : index
      %13 = vector.load %arg4[%c0_11, %c0_12] : memref<1x512xf32, #tpu.memory_space<vmem>>, vector<1x512xf32>
      %14 = vector.broadcast %13 : vector<1x512xf32> to vector<16x512xf32>
      %15 = arith.addf %12, %14 : vector<16x512xf32>
      %cst_13 = arith.constant 0.000000e+00 : f32
      %16 = vector.broadcast %cst_13 : f32 to vector<16x512xf32>
      %17 = arith.maximumf %15, %16 : vector<16x512xf32>
      %c0_14 = arith.constant 0 : index
      %c0_15 = arith.constant 0 : index
      %18 = vector.load %arg5[%c0_14, %c0_15] : memref<1x512xf32, #tpu.memory_space<vmem>>, vector<1x512xf32>
      %19 = vector.broadcast %18 : vector<1x512xf32> to vector<16x512xf32>
      %20 = arith.mulf %17, %19 : vector<16x512xf32>
      %cst_16 = arith.constant dense<0.000000e+00> : vector<16xf32>
      %21 = vector.multi_reduction <add>, %20, %cst_16 [1] : vector<16x512xf32> to vector<16xf32>
      %22 = vector.shape_cast %21 : vector<16xf32> to vector<16x1xf32>
      %c0_17 = arith.constant 0 : index
      %c0_18 = arith.constant 0 : index
      %23 = vector.load %arg6[%c0_17, %c0_18] : memref<1x1xf32, #tpu.memory_space<vmem>>, vector<1x1xf32>
      %24 = vector.broadcast %23 : vector<1x1xf32> to vector<16x1xf32>
      %25 = arith.addf %22, %24 : vector<16x1xf32>
      %c0_19 = arith.constant 0 : index
      %c0_20 = arith.constant 0 : index
      %26 = vector.load %arg7[%c0_19, %c0_20] : memref<16x1xf32, #tpu.memory_space<vmem>>, vector<16x1xf32>
      tpu.vector_store %arg7[%c0_19, %c0_20], %25 {strides = array<i32>} : memref<16x1xf32, #tpu.memory_space<vmem>>, vector<16x1xf32>,
    } else {
    }
    return
  }
  func.func @transform_0(%arg0: i32, %arg1: i32) -> (i32, i32) {
    %c0_i32 = arith.constant 0 : i32
    return %arg0, %arg1 : i32, i32
  }
  func.func @transform_1(%arg0: i32, %arg1: i32) -> (i32, i32) {
    %c0_i32 = arith.constant 0 : i32
    %c0_i32_0 = arith.constant 0 : i32
    return %arg1, %c0_i32 : i32, i32
  }
  func.func @transform_2(%arg0: i32, %arg1: i32) -> (i32, i32) {
    %c0_i32 = arith.constant 0 : i32
    %c0_i32_0 = arith.constant 0 : i32
    %c0_i32_1 = arith.constant 0 : i32
    return %c0_i32, %c0_i32_0 : i32, i32
  }
  func.func @transform_3(%arg0: i32, %arg1: i32) -> (i32, i32) {
    %c0_i32 = arith.constant 0 : i32
    %c0_i32_0 = arith.constant 0 : i32
    %c0_i32_1 = arith.constant 0 : i32
    return %c0_i32, %c0_i32_0 : i32, i32
  }
  func.func @transform_4(%arg0: i32, %arg1: i32) -> (i32, i32) {
    %c0_i32 = arith.constant 0 : i32
    %c0_i32_0 = arith.constant 0 : i32
    %c0_i32_1 = arith.constant 0 : i32
    return %c0_i32, %c0_i32_0 : i32, i32
  }
  func.func @transform_5(%arg0: i32, %arg1: i32) -> (i32, i32) {
    %c0_i32 = arith.constant 0 : i32
    %c0_i32_0 = arith.constant 0 : i32
    return %arg0, %c0_i32 : i32, i32
  }
}

</mosaic_0001>

<llo_original>
// kernel: tpu_custom_call.1
$region0: #{tpu_custom_call.1}
  #allocation0 [shape = 'u32[]', space=smem, size = 0x4, offset = 0x4, fixed_abs, tag = 'smem constant byte address 0x4 - core index']
  #allocation1 [shape = 'u32[144,128]{1,0:T(1,128)}', space=vmem, size = 0x12000, scoped, tag = 'internal scratch']
  #allocation2 [shape = 'f32[16,512]{1,0:T(8,128)}', space=vmem, size = 0x8000, scoped, tag = 'scratch operand']
  #allocation3 [shape = 'f32[1,1]{1,0:T(1,128)S(1)}', space=vmem, size = 0x200, scoped, tag = 'scoped memory for tpu_custom_call.1']
  %s0 = inlined_call_operand.hbm [shape: f32[16,1024], index: 0, kind: input, shape index: {}]
  %s1 = inlined_call_operand.hbm [shape: f32[1024,512], index: 1, kind: input, shape index: {}]
  %s2 = inlined_call_operand.hbm [shape: f32[1,512], index: 2, kind: input, shape index: {}]
  %s3 = inlined_call_operand.hbm [shape: f32[1,512], index: 3, kind: input, shape index: {}]
  %s4 = inlined_call_operand.<no memory space> [shape: f32[1,1], index: 4, kind: input, shape index: {}]
  %s5 = inlined_call_operand.vmem [shape: f32[16,1], index: 5, kind: output, shape index: {}]
  %s6 = sld [smem:[#allocation0]]
  $region77: #{tpu_custom_call.1} parent=0
    _
  %s8 = ssub.s32 1, %s6
  %s9 = scalar_select 0, %s8, %s6
  %v10 = vstv %s4
  %11 = vst [vmem:[#allocation3] sm:$0x1] %v10
  $region1: #{tpu_custom_call.1} parent=0
    #allocation4 [shape = 'u8[65536]{0}', space=vmem, size = 0x10000, scoped, tag = 'input window, operand 0']
    #allocation5 [shape = 's32[2]{0}', space=sflag, size = 0x8, scoped, tag = 'scoped memory for tpu_custom_call.1']
    #allocation6 [shape = 'u8[2097152]{0}', space=vmem, size = 0x200000, scoped, tag = 'input window, operand 1']
    #allocation7 [shape = 's32[2]{0}', space=sflag, size = 0x8, scoped, tag = 'scoped memory for tpu_custom_call.1']
    #allocation8 [shape = 'u8[2048]{0}', space=vmem, size = 0x800, scoped, tag = 'input window, operand 2, single buffered']
    #allocation9 [shape = 'u8[2048]{0}', space=vmem, size = 0x800, scoped, tag = 'input window, operand 3, single buffered']
    #allocation10 [shape = 's32[1]{0}', space=sflag, size = 0x4, scoped, tag = 'scoped memory for tpu_custom_call.1']
    %12 = vsyncpa [#allocation5], 0
    %s13 = scalar_lea.sflag [#allocation5], 1
    %14 = vsyncpa %s13, 0
    %15 = vsyncpa [#allocation7], 0
    %s16 = scalar_lea.sflag [#allocation7], 1
    %17 = vsyncpa %s16, 0
    %18 = vsyncpa [#allocation10], 0
    loop: start=0, step=1, limit=4
    $region2: #{tpu_custom_call.1} parent=1 // loop_pre_header
      _
    $region3: #{tpu_custom_call.1} parent=1 // loop_header
      %s20 = sphi 0, %s24
      %p21 = scmp.ge.s32.totalorder %s20, 4
      %s27 = sphi 0, %s39
      %s28 = sphi 0, %s35
      %s29 = sphi 0, %s27
      %s30 = sphi 0, %s28
      %s31 = sphi 0, %s29
      %s32 = sphi 0, %s30
      %s44 = sphi 0, %s46
      %s47 = sphi 0, %s44
      %s48 = sphi 0, %s47
      %s64 = sphi 0, %s48
      %s70 = sphi 0, %s72
      %s73 = sphi 0, %s70
      %s74 = sphi 0, %s73
      %s90 = sphi 0, %s74
      %s94 = sphi 0, %s94
      %s96 = sphi 0, %s94
      %s97 = sphi 0, %s96
      %s111 = sphi 0, %s97
      %s115 = sphi 0, %s115
      %s117 = sphi 0, %s115
      %s118 = sphi 0, %s117
      %s132 = sphi 0, %s118
      %s136 = sphi 0, %s136
      %s138 = sphi 0, %s136
      %s139 = sphi 0, %s138
      %s153 = sphi 0, %s139
      %s159 = sphi 0, %s161
      %s162 = sphi 0, %s159
      %s163 = sphi 0, %s162
      %s179 = sphi 0, %s163
    $region4: #{tpu_custom_call.1} parent=1 // loop_header_branch
      %23 = sbr.rel (%p21) target = $region8
    $region5: #{tpu_custom_call.1} parent=1 // loop_body
      %s25 = ssub.s32 %s20, 1
      %s26 = ssub.s32 %s20, 2
      %s33 = sadd.s32 1, %s28
      %p34 = scmp.ge.s32.totalorder %s33, 2
      %s35 = scalar_select %p34, 0, %s33
      %s36 = sadd.s32 1, %s27
      %s37 = scalar_select %p34, %s36, %s27
      %p38 = scmp.ge.s32.totalorder %s37, 1
      %s39 = scalar_select %p38, 0, %s37
      %s40 = ssub.s32 %s27, %s39
      %s41 = ssub.s32 %s28, %s35
      %s42 = sor.u32 %s40, %s41
      %p43 = scmp.eq.s32.totalorder %s42, 0
      %s45 = sadd.s32 %s44, 1
      %s46 = scalar_select %p43, %s44, %s45
      %p49 = pneg %p43
      %p50 = scmp.eq.s32.totalorder %s20, 1
      %p51 = por %p49, %p50
      %p52 = scmp.ne.s32.totalorder %s44, %s47
      %p53 = scmp.eq.s32.totalorder %s20, 0
      %p54 = por %p52, %p53
      %p55 = scmp.ne.s32.totalorder %s44, %s47
      %p56 = scmp.eq.s32.totalorder %s25, 1
      %p57 = por %p55, %p56
      %p58 = scmp.ne.s32.totalorder %s47, %s48
      %p59 = scmp.eq.s32.totalorder %s25, 0
      %p60 = por %p58, %p59
      %p61 = scmp.ne.s32.totalorder %s47, %s48
      %p62 = scmp.eq.s32.totalorder %s26, 1
      %p63 = por %p61, %p62
      %p65 = scmp.ne.s32.totalorder %s48, %s64
      %p66 = scmp.eq.s32.totalorder %s26, 0
      %p67 = por %p65, %p66
      %s68 = ssub.s32 %s28, %s35
      %p69 = scmp.eq.s32.totalorder %s68, 0
      %s71 = sadd.s32 %s70, 1
      %s72 = scalar_select %p69, %s70, %s71
      %p75 = pneg %p69
      %p76 = scmp.eq.s32.totalorder %s20, 1
      %p77 = por %p75, %p76
      %p78 = scmp.ne.s32.totalorder %s70, %s73
      %p79 = scmp.eq.s32.totalorder %s20, 0
      %p80 = por %p78, %p79
      %p81 = scmp.ne.s32.totalorder %s70, %s73
      %p82 = scmp.eq.s32.totalorder %s25, 1
      %p83 = por %p81, %p82
      %p84 = scmp.ne.s32.totalorder %s73, %s74
      %p85 = scmp.eq.s32.totalorder %s25, 0
      %p86 = por %p84, %p85
      %p87 = scmp.ne.s32.totalorder %s73, %s74
      %p88 = scmp.eq.s32.totalorder %s26, 1
      %p89 = por %p87, %p88
      %p91 = scmp.ne.s32.totalorder %s74, %s90
      %p92 = scmp.eq.s32.totalorder %s26, 0
      %p93 = por %p91, %p92
      %s95 = sadd.s32 %s94, 1
      %p98 = scmp.eq.s32.totalorder %s20, 1
      %p99 = scmp.ne.s32.totalorder %s94, %s96
      %p100 = scmp.eq.s32.totalorder %s20, 0
      %p101 = por %p99, %p100
      %p102 = scmp.ne.s32.totalorder %s94, %s96
      %p103 = scmp.eq.s32.totalorder %s25, 1
      %p104 = por %p102, %p103
      %p105 = scmp.ne.s32.totalorder %s96, %s97
      %p106 = scmp.eq.s32.totalorder %s25, 0
      %p107 = por %p105, %p106
      %p108 = scmp.ne.s32.totalorder %s96, %s97
      %p109 = scmp.eq.s32.totalorder %s26, 1
      %p110 = por %p108, %p109
      %p112 = scmp.ne.s32.totalorder %s97, %s111
      %p113 = scmp.eq.s32.totalorder %s26, 0
      %p114 = por %p112, %p113
      %s116 = sadd.s32 %s115, 1
      %p119 = scmp.eq.s32.totalorder %s20, 1
      %p120 = scmp.ne.s32.totalorder %s115, %s117
      %p121 = scmp.eq.s32.totalorder %s20, 0
      %p122 = por %p120, %p121
      %p123 = scmp.ne.s32.totalorder %s115, %s117
      %p124 = scmp.eq.s32.totalorder %s25, 1
      %p125 = por %p123, %p124
      %p126 = scmp.ne.s32.totalorder %s117, %s118
      %p127 = scmp.eq.s32.totalorder %s25, 0
      %p128 = por %p126, %p127
      %p129 = scmp.ne.s32.totalorder %s117, %s118
      %p130 = scmp.eq.s32.totalorder %s26, 1
      %p131 = por %p129, %p130
      %p133 = scmp.ne.s32.totalorder %s118, %s132
      %p134 = scmp.eq.s32.totalorder %s26, 0
      %p135 = por %p133, %p134
      %s137 = sadd.s32 %s136, 1
      %p140 = scmp.eq.s32.totalorder %s20, 1
      %p141 = scmp.ne.s32.totalorder %s136, %s138
      %p142 = scmp.eq.s32.totalorder %s20, 0
      %p143 = por %p141, %p142
      %p144 = scmp.ne.s32.totalorder %s136, %s138
      %p145 = scmp.eq.s32.totalorder %s25, 1
      %p146 = por %p144, %p145
      %p147 = scmp.ne.s32.totalorder %s138, %s139
      %p148 = scmp.eq.s32.totalorder %s25, 0
      %p149 = por %p147, %p148
      %p150 = scmp.ne.s32.totalorder %s138, %s139
      %p151 = scmp.eq.s32.totalorder %s26, 1
      %p152 = por %p150, %p151
      %p154 = scmp.ne.s32.totalorder %s139, %s153
      %p155 = scmp.eq.s32.totalorder %s26, 0
      %p156 = por %p154, %p155
      %s157 = ssub.s32 %s27, %s39
      %p158 = scmp.eq.s32.totalorder %s157, 0
      %s160 = sadd.s32 %s159, 1
      %s161 = scalar_select %p158, %s159, %s160
      %p164 = pneg %p158
      %p165 = scmp.eq.s32.totalorder %s20, 1
      %p166 = por %p164, %p165
      %p167 = scmp.ne.s32.totalorder %s159, %s162
      %p168 = scmp.eq.s32.totalorder %s20, 0
      %p169 = por %p167, %p168
      %p170 = scmp.ne.s32.totalorder %s159, %s162
      %p171 = scmp.eq.s32.totalorder %s25, 1
      %p172 = por %p170, %p171
      %p173 = scmp.ne.s32.totalorder %s162, %s163
      %p174 = scmp.eq.s32.totalorder %s25, 0
      %p175 = por %p173, %p174
      %p176 = scmp.ne.s32.totalorder %s162, %s163
      %p177 = scmp.eq.s32.totalorder %s26, 1
      %p178 = por %p176, %p177
      %p180 = scmp.ne.s32.totalorder %s163, %s179
      %p181 = scmp.eq.s32.totalorder %s26, 0
      %p182 = por %p180, %p181
      %p183 = scmp.le.s32.totalorder 1, %s20
      %p184 = scmp.lt.s32.totalorder %s20, 3
      %p185 = pnand %p183, %p184
      %p186 = pneg %p185
      // Predicated region
      $region9: #{tpu_custom_call.1} parent=5 // pred_check
        _
      $region10: #{tpu_custom_call.1} parent=5 // pred_check_branch
        %188 = sbr.rel (%p185) target = $region12
      $region11: #{tpu_custom_call.1} parent=5 // pred_region
        %s189 = ssub.s32 %s20, 1
        // Predicated region
        $region13: #{tpu_custom_call.1} parent=11 // pred_check
          %p190 = pneg %p107
        $region14: #{tpu_custom_call.1} parent=11 // pred_check_branch
          %192 = sbr.rel (%p190) target = $region16
        $region15: #{tpu_custom_call.1} parent=11 // pred_region
          %s194 = ssub.s32 64, 64
          %195 = vsyncadd [#allocation7], %s194
          %s197 = sshll.u32 [#allocation8], 4
          %s198 = int_to_ptr.vmem [resolvable:$true] %s197
          %200 = dma.hbm_to_vmem [thread:$0]  %s2, 64, %s198, [#allocation7]
        $region16: #{tpu_custom_call.1} parent=11 // pred_fallthru
          _
        // Predicated region
        $region17: #{tpu_custom_call.1} parent=11 // pred_check
          %p201 = pneg %p128
        $region18: #{tpu_custom_call.1} parent=11 // pred_check_branch
          %203 = sbr.rel (%p201) target = $region20
        $region19: #{tpu_custom_call.1} parent=11 // pred_region
          %s205 = ssub.s32 64, 64
          %206 = vsyncadd [#allocation10], %s205
          %s208 = sshll.u32 [#allocation9], 4
          %s209 = int_to_ptr.vmem [resolvable:$true] %s208
          %211 = dma.hbm_to_vmem [thread:$0]  %s3, 64, %s209, [#allocation10]
        $region20: #{tpu_custom_call.1} parent=11 // pred_fallthru
          _
        // Predicated region
        $region21: #{tpu_custom_call.1} parent=11 // pred_check
          %p212 = pneg %p149
        $region22: #{tpu_custom_call.1} parent=11 // pred_check_branch
          %214 = sbr.rel (%p212) target = $region24
        $region23: #{tpu_custom_call.1} parent=11 // pred_region
          _
        $region24: #{tpu_custom_call.1} parent=11 // pred_fallthru
          _
      $region12: #{tpu_custom_call.1} parent=5 // pred_fallthru
        _
      %p215 = scmp.lt.s32.totalorder %s20, 2
      // Predicated region
      $region25: #{tpu_custom_call.1} parent=5 // pred_check
        %p216 = pneg %p215
      $region26: #{tpu_custom_call.1} parent=5 // pred_check_branch
        %218 = sbr.rel (%p216) target = $region28
      $region27: #{tpu_custom_call.1} parent=5 // pred_region
        // Predicated region
        $region29: #{tpu_custom_call.1} parent=27 // pred_check
          %p219 = pneg %p54
        $region30: #{tpu_custom_call.1} parent=27 // pred_check_branch
          %221 = sbr.rel (%p219) target = $region32
        $region31: #{tpu_custom_call.1} parent=27 // pred_region
          %s222 = sand.u32 %s44, 1
          %s223 = scalar_lea.sflag [#allocation5], %s222
          %s224 = sand.u32 %s44, 1
          %s225 = smul.addr %s224, 64
          %s226 = scalar_lea.vmem [#allocation4], %s225
          %s227 = smul.u32 2, %s27
          %s228 = smul.u32 4, %s28
          %s230 = ssub.s32 1024, 1024
          %231 = vsyncadd %s223, %s230
          %s232 = smul.addr %s227, 8
          %s233 = sadd.s32 %s228, %s232
          %s234 = smul.addr %s233, 128
          %s235 = scalar_lea.hbm %s0, %s234
          %s236 = sshll.u32 %s226, 4
          %s237 = int_to_ptr.vmem [resolvable:$true] %s236
          %242 = dma.hbm_to_vmem [thread:$0]  %s235, 1024, %s237, %s223, 1024, 512, 32
        $region32: #{tpu_custom_call.1} parent=27 // pred_fallthru
          _
        // Predicated region
        $region33: #{tpu_custom_call.1} parent=27 // pred_check
          %p243 = pneg %p80
        $region34: #{tpu_custom_call.1} parent=27 // pred_check_branch
          %245 = sbr.rel (%p243) target = $region36
        $region35: #{tpu_custom_call.1} parent=27 // pred_region
          %s246 = sand.u32 %s20, 1
          %s247 = scalar_lea.sflag [#allocation7], %s246
          %s248 = sand.u32 %s70, 1
          %s249 = smul.addr %s248, 2048
          %s250 = scalar_lea.vmem [#allocation6], %s249
          %s251 = smul.u32 64, %s28
          %s253 = ssub.s32 32768, 32768
          %254 = vsyncadd %s247, %s253
          %s255 = smul.addr %s251, 4
          %s256 = smul.addr %s255, 128
          %s257 = scalar_lea.hbm %s1, %s256
          %s258 = sshll.u32 %s250, 4
          %s259 = int_to_ptr.vmem [resolvable:$true] %s258
          %264 = dma.hbm_to_vmem [thread:$0]  %s257, 32768, %s259, %s247, 512, 512, 32
        $region36: #{tpu_custom_call.1} parent=27 // pred_fallthru
          _
      $region28: #{tpu_custom_call.1} parent=5 // pred_fallthru
        _
      %p265 = scmp.le.s32.totalorder 1, %s20
      %p266 = scmp.lt.s32.totalorder %s20, 3
      %p267 = pnand %p265, %p266
      %p268 = pneg %p267
      // Predicated region
      $region37: #{tpu_custom_call.1} parent=5 // pred_check
        _
      $region38: #{tpu_custom_call.1} parent=5 // pred_check_branch
        %270 = sbr.rel (%p267) target = $region40
      $region39: #{tpu_custom_call.1} parent=5 // pred_region
        %s271 = ssub.s32 %s20, 1
        %s272 = sand.u32 %s47, 1
        %s273 = scalar_lea.sflag [#allocation5], %s272
        %s274 = sand.u32 %s47, 1
        %s275 = smul.addr %s274, 64
        %s276 = scalar_lea.vmem [#allocation4], %s275
        // Predicated region
        $region41: #{tpu_custom_call.1} parent=39 // pred_check
          %p277 = pneg %p60
        $region42: #{tpu_custom_call.1} parent=39 // pred_check_branch
          %279 = sbr.rel (%p277) target = $region44
        $region43: #{tpu_custom_call.1} parent=39 // pred_region
          %280 = dma.done %s273, 1024
        $region44: #{tpu_custom_call.1} parent=39 // pred_fallthru
          _
        %s281 = sand.u32 %s25, 1
        %s282 = scalar_lea.sflag [#allocation7], %s281
        %s283 = sand.u32 %s73, 1
        %s284 = smul.addr %s283, 2048
        %s285 = scalar_lea.vmem [#allocation6], %s284
        // Predicated region
        $region45: #{tpu_custom_call.1} parent=39 // pred_check
          %p286 = pneg %p86
        $region46: #{tpu_custom_call.1} parent=39 // pred_check_branch
          %288 = sbr.rel (%p286) target = $region48
        $region47: #{tpu_custom_call.1} parent=39 // pred_region
          %289 = dma.done %s282, 32768
        $region48: #{tpu_custom_call.1} parent=39 // pred_fallthru
          _
        // Predicated region
        $region49: #{tpu_custom_call.1} parent=39 // pred_check
          %p290 = pneg %p107
        $region50: #{tpu_custom_call.1} parent=39 // pred_check_branch
          %292 = sbr.rel (%p290) target = $region52
        $region51: #{tpu_custom_call.1} parent=39 // pred_region
          %293 = dma.done [#allocation7], 64
        $region52: #{tpu_custom_call.1} parent=39 // pred_fallthru
          _
        // Predicated region
        $region53: #{tpu_custom_call.1} parent=39 // pred_check
          %p294 = pneg %p128
        $region54: #{tpu_custom_call.1} parent=39 // pred_check_branch
          %296 = sbr.rel (%p294) target = $region56
        $region55: #{tpu_custom_call.1} parent=39 // pred_region
          %297 = dma.done [#allocation10], 64
        $region56: #{tpu_custom_call.1} parent=39 // pred_fallthru
          _
        %s298 = sand.u32 %s47, 1
        %s299 = scalar_lea.sflag [#allocation5], %s298
        %s300 = sand.u32 %s47, 1
        %s301 = smul.addr %s300, 64
        %s302 = scalar_lea.vmem [#allocation4], %s301
        %p303 = pneg %p60
        %p304 = pneg %p57
        %s305 = sand.u32 %s25, 1
        %s306 = scalar_lea.sflag [#allocation7], %s305
        %s307 = sand.u32 %s73, 1
        %s308 = smul.addr %s307, 2048
        %s309 = scalar_lea.vmem [#allocation6], %s308
        %p310 = pneg %p86
        %p311 = pneg %p83
        %p312 = pneg %p107
        %p313 = pneg %p104
        %p314 = pneg %p128
        %p315 = pneg %p125
        %p316 = pneg %p149
        %p317 = pneg %p146
        %p318 = pneg %p175
        %p319 = pneg %p172
        %s320 = smul.u32 2, %s29
        %p321 = scmp.lt.s32.totalorder %s320, 1
        %s322 = scalar_select %p321, %s320, 1
        %s323 = smul.addr %s322, 8
        %s324 = scalar_lea.vmem %s5, %s323
        %s325 = smul.u32 2, %s29
        %s326 = smul.u32 4, %s30
        %s327 = smul.u32 64, %s30
        %s328 = smul.u32 2, %s29
        %p329 = scmp.lt.s32.totalorder %s328, 1
        %s330 = scalar_select %p329, %s328, 1
        %s331 = smul.addr %s330, 8
        %s332 = scalar_lea.vmem %s5, %s331
        %s333 = smul.u32 2, %s29
        %p334 = scmp.eq.s32.totalorder %s30, 0
        // Predicated region
        $region57: #{tpu_custom_call.1} parent=39 // pred_check
          %p335 = pneg %p334
        $region58: #{tpu_custom_call.1} parent=39 // pred_check_branch
          %337 = sbr.rel (%p335) target = $region60
        $region59: #{tpu_custom_call.1} parent=39 // pred_region
          %338 = vst [vmem:[#allocation2] sm:$0xff] 0.0
          %339 = vst [vmem:[#allocation2 + $0x8] sm:$0xff] 0.0
          %340 = vst [vmem:[#allocation2 + $0x10] sm:$0xff] 0.0
          %341 = vst [vmem:[#allocation2 + $0x18] sm:$0xff] 0.0
          %342 = vst [vmem:[#allocation2 + $0x20] sm:$0xff] 0.0
          %343 = vst [vmem:[#allocation2 + $0x28] sm:$0xff] 0.0
          %344 = vst [vmem:[#allocation2 + $0x30] sm:$0xff] 0.0
          %345 = vst [vmem:[#allocation2 + $0x38] sm:$0xff] 0.0
        $region60: #{tpu_custom_call.1} parent=39 // pred_fallthru
          _
        %v346 = vld [vmem:[#allocation2] sm:$0xff]
        %v347 = vld [vmem:[#allocation2 + $0x8] sm:$0xff]
        %v348 = vld [vmem:[#allocation2 + $0x10] sm:$0xff]
        %v349 = vld [vmem:[#allocation2 + $0x18] sm:$0xff]
        %v350 = vld [vmem:[#allocation2 + $0x20] sm:$0xff]
        %v351 = vld [vmem:[#allocation2 + $0x28] sm:$0xff]
        %v352 = vld [vmem:[#allocation2 + $0x30] sm:$0xff]
        %v353 = vld [vmem:[#allocation2 + $0x38] sm:$0xff]
        %v354 = vld [vmem:[%s276] sm:$0xff]
        %v355 = vld [vmem:[%s276 + $0x8] sm:$0xff]
        %v356 = vld [vmem:[%s276 + $0x10] sm:$0xff]
        %v357 = vld [vmem:[%s276 + $0x18] sm:$0xff]
        %v358 = vld [vmem:[%s276 + $0x20] sm:$0xff]
        %v359 = vld [vmem:[%s276 + $0x28] sm:$0xff]
        %v360 = vld [vmem:[%s276 + $0x30] sm:$0xff]
        %v361 = vld [vmem:[%s276 + $0x38] sm:$0xff]
        %v362 = vld [vmem:[%s285] sm:$0xff]
        %v363 = vld [vmem:[%s285 + $0x8] sm:$0xff]
        %v364 = vld [vmem:[%s285 + $0x10] sm:$0xff]
        %v365 = vld [vmem:[%s285 + $0x18] sm:$0xff]
        %v366 = vld [vmem:[%s285 + $0x20] sm:$0xff]
        %v367 = vld [vmem:[%s285 + $0x28] sm:$0xff]
        %v368 = vld [vmem:[%s285 + $0x30] sm:$0xff]
        %v369 = vld [vmem:[%s285 + $0x38] sm:$0xff]
        %v370 = vld [vmem:[%s285 + $0x40] sm:$0xff]
        %v371 = vld [vmem:[%s285 + $0x48] sm:$0xff]
        %v372 = vld [vmem:[%s285 + $0x50] sm:$0xff]
        %v373 = vld [vmem:[%s285 + $0x58] sm:$0xff]
        %v374 = vld [vmem:[%s285 + $0x60] sm:$0xff]
        %v375 = vld [vmem:[%s285 + $0x68] sm:$0xff]
        %v376 = vld [vmem:[%s285 + $0x70] sm:$0xff]
        %v377 = vld [vmem:[%s285 + $0x78] sm:$0xff]
        %v378 = vld [vmem:[%s285 + $0x80] sm:$0xff]
        %v379 = vld [vmem:[%s285 + $0x88] sm:$0xff]
        %v380 = vld [vmem:[%s285 + $0x90] sm:$0xff]
        %v381 = vld [vmem:[%s285 + $0x98] sm:$0xff]
        %v382 = vld [vmem:[%s285 + $0xa0] sm:$0xff]
        %v383 = vld [vmem:[%s285 + $0xa8] sm:$0xff]
        %v384 = vld [vmem:[%s285 + $0xb0] sm:$0xff]
        %v385 = vld [vmem:[%s285 + $0xb8] sm:$0xff]
        %v386 = vld [vmem:[%s285 + $0xc0] sm:$0xff]
        %v387 = vld [vmem:[%s285 + $0xc8] sm:$0xff]
        %v388 = vld [vmem:[%s285 + $0xd0] sm:$0xff]
        %v389 = vld [vmem:[%s285 + $0xd8] sm:$0xff]
        %v390 = vld [vmem:[%s285 + $0xe0] sm:$0xff]
        %v391 = vld [vmem:[%s285 + $0xe8] sm:$0xff]
        %v392 = vld [vmem:[%s285 + $0xf0] sm:$0xff]
        %v393 = vld [vmem:[%s285 + $0xf8] sm:$0xff]
        %v394 = vld [vmem:[%s285 + $0x100] sm:$0xff]
        %v395 = vld [vmem:[%s285 + $0x108] sm:$0xff]
        %v396 = vld [vmem:[%s285 + $0x110] sm:$0xff]
        %v397 = vld [vmem:[%s285 + $0x118] sm:$0xff]
        %v398 = vld [vmem:[%s285 + $0x120] sm:$0xff]
        %v399 = vld [vmem:[%s285 + $0x128] sm:$0xff]
        %v400 = vld [vmem:[%s285 + $0x130] sm:$0xff]
        %v401 = vld [vmem:[%s285 + $0x138] sm:$0xff]
        %v402 = vld [vmem:[%s285 + $0x140] sm:$0xff]
        %v403 = vld [vmem:[%s285 + $0x148] sm:$0xff]
        %v404 = vld [vmem:[%s285 + $0x150] sm:$0xff]
        %v405 = vld [vmem:[%s285 + $0x158] sm:$0xff]
        %v406 = vld [vmem:[%s285 + $0x160] sm:$0xff]
        %v407 = vld [vmem:[%s285 + $0x168] sm:$0xff]
        %v408 = vld [vmem:[%s285 + $0x170] sm:$0xff]
        %v409 = vld [vmem:[%s285 + $0x178] sm:$0xff]
        %v410 = vld [vmem:[%s285 + $0x180] sm:$0xff]
        %v411 = vld [vmem:[%s285 + $0x188] sm:$0xff]
        %v412 = vld [vmem:[%s285 + $0x190] sm:$0xff]
        %v413 = vld [vmem:[%s285 + $0x198] sm:$0xff]
        %v414 = vld [vmem:[%s285 + $0x1a0] sm:$0xff]
        %v415 = vld [vmem:[%s285 + $0x1a8] sm:$0xff]
        %v416 = vld [vmem:[%s285 + $0x1b0] sm:$0xff]
        %v417 = vld [vmem:[%s285 + $0x1b8] sm:$0xff]
        %v418 = vld [vmem:[%s285 + $0x1c0] sm:$0xff]
        %v419 = vld [vmem:[%s285 + $0x1c8] sm:$0xff]
        %v420 = vld [vmem:[%s285 + $0x1d0] sm:$0xff]
        %v421 = vld [vmem:[%s285 + $0x1d8] sm:$0xff]
        %v422 = vld [vmem:[%s285 + $0x1e0] sm:$0xff]
        %v423 = vld [vmem:[%s285 + $0x1e8] sm:$0xff]
        %v424 = vld [vmem:[%s285 + $0x1f0] sm:$0xff]
        %v425 = vld [vmem:[%s285 + $0x1f8] sm:$0xff]
        %v426 = vld [vmem:[%s285 + $0x200] sm:$0xff]
        %v427 = vld [vmem:[%s285 + $0x208] sm:$0xff]
        %v428 = vld [vmem:[%s285 + $0x210] sm:$0xff]
        %v429 = vld [vmem:[%s285 + $0x218] sm:$0xff]
        %v430 = vld [vmem:[%s285 + $0x220] sm:$0xff]
        %v431 = vld [vmem:[%s285 + $0x228] sm:$0xff]
        %v432 = vld [vmem:[%s285 + $0x230] sm:$0xff]
        %v433 = vld [vmem:[%s285 + $0x238] sm:$0xff]
        %v434 = vld [vmem:[%s285 + $0x240] sm:$0xff]
        %v435 = vld [vmem:[%s285 + $0x248] sm:$0xff]
        %v436 = vld [vmem:[%s285 + $0x250] sm:$0xff]
        %v437 = vld [vmem:[%s285 + $0x258] sm:$0xff]
        %v438 = vld [vmem:[%s285 + $0x260] sm:$0xff]
        %v439 = vld [vmem:[%s285 + $0x268] sm:$0xff]
        %v440 = vld [vmem:[%s285 + $0x270] sm:$0xff]
        %v441 = vld [vmem:[%s285 + $0x278] sm:$0xff]
        %v442 = vld [vmem:[%s285 + $0x280] sm:$0xff]
        %v443 = vld [vmem:[%s285 + $0x288] sm:$0xff]
        %v444 = vld [vmem:[%s285 + $0x290] sm:$0xff]
        %v445 = vld [vmem:[%s285 + $0x298] sm:$0xff]
        %v446 = vld [vmem:[%s285 + $0x2a0] sm:$0xff]
        %v447 = vld [vmem:[%s285 + $0x2a8] sm:$0xff]
        %v448 = vld [vmem:[%s285 + $0x2b0] sm:$0xff]
        %v449 = vld [vmem:[%s285 + $0x2b8] sm:$0xff]
        %v450 = vld [vmem:[%s285 + $0x2c0] sm:$0xff]
        %v451 = vld [vmem:[%s285 + $0x2c8] sm:$0xff]
        %v452 = vld [vmem:[%s285 + $0x2d0] sm:$0xff]
        %v453 = vld [vmem:[%s285 + $0x2d8] sm:$0xff]
        %v454 = vld [vmem:[%s285 + $0x2e0] sm:$0xff]
        %v455 = vld [vmem:[%s285 + $0x2e8] sm:$0xff]
        %v456 = vld [vmem:[%s285 + $0x2f0] sm:$0xff]
        %v457 = vld [vmem:[%s285 + $0x2f8] sm:$0xff]
        %v458 = vld [vmem:[%s285 + $0x300] sm:$0xff]
        %v459 = vld [vmem:[%s285 + $0x308] sm:$0xff]
        %v460 = vld [vmem:[%s285 + $0x310] sm:$0xff]
        %v461 = vld [vmem:[%s285 + $0x318] sm:$0xff]
        %v462 = vld [vmem:[%s285 + $0x320] sm:$0xff]
        %v463 = vld [vmem:[%s285 + $0x328] sm:$0xff]
        %v464 = vld [vmem:[%s285 + $0x330] sm:$0xff]
        %v465 = vld [vmem:[%s285 + $0x338] sm:$0xff]
        %v466 = vld [vmem:[%s285 + $0x340] sm:$0xff]
        %v467 = vld [vmem:[%s285 + $0x348] sm:$0xff]
        %v468 = vld [vmem:[%s285 + $0x350] sm:$0xff]
        %v469 = vld [vmem:[%s285 + $0x358] sm:$0xff]
        %v470 = vld [vmem:[%s285 + $0x360] sm:$0xff]
        %v471 = vld [vmem:[%s285 + $0x368] sm:$0xff]
        %v472 = vld [vmem:[%s285 + $0x370] sm:$0xff]
        %v473 = vld [vmem:[%s285 + $0x378] sm:$0xff]
        %v474 = vld [vmem:[%s285 + $0x380] sm:$0xff]
        %v475 = vld [vmem:[%s285 + $0x388] sm:$0xff]
        %v476 = vld [vmem:[%s285 + $0x390] sm:$0xff]
        %v477 = vld [vmem:[%s285 + $0x398] sm:$0xff]
        %v478 = vld [vmem:[%s285 + $0x3a0] sm:$0xff]
        %v479 = vld [vmem:[%s285 + $0x3a8] sm:$0xff]
        %v480 = vld [vmem:[%s285 + $0x3b0] sm:$0xff]
        %v481 = vld [vmem:[%s285 + $0x3b8] sm:$0xff]
        %v482 = vld [vmem:[%s285 + $0x3c0] sm:$0xff]
        %v483 = vld [vmem:[%s285 + $0x3c8] sm:$0xff]
        %v484 = vld [vmem:[%s285 + $0x3d0] sm:$0xff]
        %v485 = vld [vmem:[%s285 + $0x3d8] sm:$0xff]
        %v486 = vld [vmem:[%s285 + $0x3e0] sm:$0xff]
        %v487 = vld [vmem:[%s285 + $0x3e8] sm:$0xff]
        %v488 = vld [vmem:[%s285 + $0x3f0] sm:$0xff]
        %v489 = vld [vmem:[%s285 + $0x3f8] sm:$0xff]
        %v490 = vld [vmem:[%s285 + $0x400] sm:$0xff]
        %v491 = vld [vmem:[%s285 + $0x408] sm:$0xff]
        %v492 = vld [vmem:[%s285 + $0x410] sm:$0xff]
        %v493 = vld [vmem:[%s285 + $0x418] sm:$0xff]
        %v494 = vld [vmem:[%s285 + $0x420] sm:$0xff]
        %v495 = vld [vmem:[%s285 + $0x428] sm:$0xff]
        %v496 = vld [vmem:[%s285 + $0x430] sm:$0xff]
        %v497 = vld [vmem:[%s285 + $0x438] sm:$0xff]
        %v498 = vld [vmem:[%s285 + $0x440] sm:$0xff]
        %v499 = vld [vmem:[%s285 + $0x448] sm:$0xff]
        %v500 = vld [vmem:[%s285 + $0x450] sm:$0xff]
        %v501 = vld [vmem:[%s285 + $0x458] sm:$0xff]
        %v502 = vld [vmem:[%s285 + $0x460] sm:$0xff]
        %v503 = vld [vmem:[%s285 + $0x468] sm:$0xff]
        %v504 = vld [vmem:[%s285 + $0x470] sm:$0xff]
        %v505 = vld [vmem:[%s285 + $0x478] sm:$0xff]
        %v506 = vld [vmem:[%s285 + $0x480] sm:$0xff]
        %v507 = vld [vmem:[%s285 + $0x488] sm:$0xff]
        %v508 = vld [vmem:[%s285 + $0x490] sm:$0xff]
        %v509 = vld [vmem:[%s285 + $0x498] sm:$0xff]
        %v510 = vld [vmem:[%s285 + $0x4a0] sm:$0xff]
        %v511 = vld [vmem:[%s285 + $0x4a8] sm:$0xff]
        %v512 = vld [vmem:[%s285 + $0x4b0] sm:$0xff]
        %v513 = vld [vmem:[%s285 + $0x4b8] sm:$0xff]
        %v514 = vld [vmem:[%s285 + $0x4c0] sm:$0xff]
        %v515 = vld [vmem:[%s285 + $0x4c8] sm:$0xff]
        %v516 = vld [vmem:[%s285 + $0x4d0] sm:$0xff]
        %v517 = vld [vmem:[%s285 + $0x4d8] sm:$0xff]
        %v518 = vld [vmem:[%s285 + $0x4e0] sm:$0xff]
        %v519 = vld [vmem:[%s285 + $0x4e8] sm:$0xff]
        %v520 = vld [vmem:[%s285 + $0x4f0] sm:$0xff]
        %v521 = vld [vmem:[%s285 + $0x4f8] sm:$0xff]
        %v522 = vld [vmem:[%s285 + $0x500] sm:$0xff]
        %v523 = vld [vmem:[%s285 + $0x508] sm:$0xff]
        %v524 = vld [vmem:[%s285 + $0x510] sm:$0xff]
        %v525 = vld [vmem:[%s285 + $0x518] sm:$0xff]
        %v526 = vld [vmem:[%s285 + $0x520] sm:$0xff]
        %v527 = vld [vmem:[%s285 + $0x528] sm:$0xff]
        %v528 = vld [vmem:[%s285 + $0x530] sm:$0xff]
        %v529 = vld [vmem:[%s285 + $0x538] sm:$0xff]
        %v530 = vld [vmem:[%s285 + $0x540] sm:$0xff]
        %v531 = vld [vmem:[%s285 + $0x548] sm:$0xff]
        %v532 = vld [vmem:[%s285 + $0x550] sm:$0xff]
        %v533 = vld [vmem:[%s285 + $0x558] sm:$0xff]
        %v534 = vld [vmem:[%s285 + $0x560] sm:$0xff]
        %v535 = vld [vmem:[%s285 + $0x568] sm:$0xff]
        %v536 = vld [vmem:[%s285 + $0x570] sm:$0xff]
        %v537 = vld [vmem:[%s285 + $0x578] sm:$0xff]
        %v538 = vld [vmem:[%s285 + $0x580] sm:$0xff]
        %v539 = vld [vmem:[%s285 + $0x588] sm:$0xff]
        %v540 = vld [vmem:[%s285 + $0x590] sm:$0xff]
        %v541 = vld [vmem:[%s285 + $0x598] sm:$0xff]
        %v542 = vld [vmem:[%s285 + $0x5a0] sm:$0xff]
        %v543 = vld [vmem:[%s285 + $0x5a8] sm:$0xff]
        %v544 = vld [vmem:[%s285 + $0x5b0] sm:$0xff]
        %v545 = vld [vmem:[%s285 + $0x5b8] sm:$0xff]
        %v546 = vld [vmem:[%s285 + $0x5c0] sm:$0xff]
        %v547 = vld [vmem:[%s285 + $0x5c8] sm:$0xff]
        %v548 = vld [vmem:[%s285 + $0x5d0] sm:$0xff]
        %v549 = vld [vmem:[%s285 + $0x5d8] sm:$0xff]
        %v550 = vld [vmem:[%s285 + $0x5e0] sm:$0xff]
        %v551 = vld [vmem:[%s285 + $0x5e8] sm:$0xff]
        %v552 = vld [vmem:[%s285 + $0x5f0] sm:$0xff]
        %v553 = vld [vmem:[%s285 + $0x5f8] sm:$0xff]
        %v554 = vld [vmem:[%s285 + $0x600] sm:$0xff]
        %v555 = vld [vmem:[%s285 + $0x608] sm:$0xff]
        %v556 = vld [vmem:[%s285 + $0x610] sm:$0xff]
        %v557 = vld [vmem:[%s285 + $0x618] sm:$0xff]
        %v558 = vld [vmem:[%s285 + $0x620] sm:$0xff]
        %v559 = vld [vmem:[%s285 + $0x628] sm:$0xff]
        %v560 = vld [vmem:[%s285 + $0x630] sm:$0xff]
        %v561 = vld [vmem:[%s285 + $0x638] sm:$0xff]
        %v562 = vld [vmem:[%s285 + $0x640] sm:$0xff]
        %v563 = vld [vmem:[%s285 + $0x648] sm:$0xff]
        %v564 = vld [vmem:[%s285 + $0x650] sm:$0xff]
        %v565 = vld [vmem:[%s285 + $0x658] sm:$0xff]
        %v566 = vld [vmem:[%s285 + $0x660] sm:$0xff]
        %v567 = vld [vmem:[%s285 + $0x668] sm:$0xff]
        %v568 = vld [vmem:[%s285 + $0x670] sm:$0xff]
        %v569 = vld [vmem:[%s285 + $0x678] sm:$0xff]
        %v570 = vld [vmem:[%s285 + $0x680] sm:$0xff]
        %v571 = vld [vmem:[%s285 + $0x688] sm:$0xff]
        %v572 = vld [vmem:[%s285 + $0x690] sm:$0xff]
        %v573 = vld [vmem:[%s285 + $0x698] sm:$0xff]
        %v574 = vld [vmem:[%s285 + $0x6a0] sm:$0xff]
        %v575 = vld [vmem:[%s285 + $0x6a8] sm:$0xff]
        %v576 = vld [vmem:[%s285 + $0x6b0] sm:$0xff]
        %v577 = vld [vmem:[%s285 + $0x6b8] sm:$0xff]
        %v578 = vld [vmem:[%s285 + $0x6c0] sm:$0xff]
        %v579 = vld [vmem:[%s285 + $0x6c8] sm:$0xff]
        %v580 = vld [vmem:[%s285 + $0x6d0] sm:$0xff]
        %v581 = vld [vmem:[%s285 + $0x6d8] sm:$0xff]
        %v582 = vld [vmem:[%s285 + $0x6e0] sm:$0xff]
        %v583 = vld [vmem:[%s285 + $0x6e8] sm:$0xff]
        %v584 = vld [vmem:[%s285 + $0x6f0] sm:$0xff]
        %v585 = vld [vmem:[%s285 + $0x6f8] sm:$0xff]
        %v586 = vld [vmem:[%s285 + $0x700] sm:$0xff]
        %v587 = vld [vmem:[%s285 + $0x708] sm:$0xff]
        %v588 = vld [vmem:[%s285 + $0x710] sm:$0xff]
        %v589 = vld [vmem:[%s285 + $0x718] sm:$0xff]
        %v590 = vld [vmem:[%s285 + $0x720] sm:$0xff]
        %v591 = vld [vmem:[%s285 + $0x728] sm:$0xff]
        %v592 = vld [vmem:[%s285 + $0x730] sm:$0xff]
        %v593 = vld [vmem:[%s285 + $0x738] sm:$0xff]
        %v594 = vld [vmem:[%s285 + $0x740] sm:$0xff]
        %v595 = vld [vmem:[%s285 + $0x748] sm:$0xff]
        %v596 = vld [vmem:[%s285 + $0x750] sm:$0xff]
        %v597 = vld [vmem:[%s285 + $0x758] sm:$0xff]
        %v598 = vld [vmem:[%s285 + $0x760] sm:$0xff]
        %v599 = vld [vmem:[%s285 + $0x768] sm:$0xff]
        %v600 = vld [vmem:[%s285 + $0x770] sm:$0xff]
        %v601 = vld [vmem:[%s285 + $0x778] sm:$0xff]
        %v602 = vld [vmem:[%s285 + $0x780] sm:$0xff]
        %v603 = vld [vmem:[%s285 + $0x788] sm:$0xff]
        %v604 = vld [vmem:[%s285 + $0x790] sm:$0xff]
        %v605 = vld [vmem:[%s285 + $0x798] sm:$0xff]
        %v606 = vld [vmem:[%s285 + $0x7a0] sm:$0xff]
        %v607 = vld [vmem:[%s285 + $0x7a8] sm:$0xff]
        %v608 = vld [vmem:[%s285 + $0x7b0] sm:$0xff]
        %v609 = vld [vmem:[%s285 + $0x7b8] sm:$0xff]
        %v610 = vld [vmem:[%s285 + $0x7c0] sm:$0xff]
        %v611 = vld [vmem:[%s285 + $0x7c8] sm:$0xff]
        %v612 = vld [vmem:[%s285 + $0x7d0] sm:$0xff]
        %v613 = vld [vmem:[%s285 + $0x7d8] sm:$0xff]
        %v614 = vld [vmem:[%s285 + $0x7e0] sm:$0xff]
        %v615 = vld [vmem:[%s285 + $0x7e8] sm:$0xff]
        %v616 = vld [vmem:[%s285 + $0x7f0] sm:$0xff]
        %v617 = vld [vmem:[%s285 + $0x7f8] sm:$0xff]
        %618 = vmatprep.subr.mxu0 %v423
        %619 = vmatpush1.msra.mxu0 %v422
        %620 = vmatprep.subr.mxu0 %v419
        %621 = vmatpush1.msra.mxu0 %v418
        %622 = vmatprep.subr.mxu0 %v415
        %623 = vmatpush1.msra.mxu0 %v414
        %624 = vmatprep.subr.mxu0 %v411
        %625 = vmatpush1.msra.mxu0 %v410
        %626 = vmatprep.subr.mxu0 %v407
        %627 = vmatpush1.msra.mxu0 %v406
        %628 = vmatprep.subr.mxu0 %v403
        %629 = vmatpush1.msra.mxu0 %v402
        %630 = vmatprep.subr.mxu0 %v399
        %631 = vmatpush1.msra.mxu0 %v398
        %632 = vmatprep.subr.mxu0 %v395
        %633 = vmatpush1.msra.mxu0 %v394
        %634 = vmatprep.subr.mxu0 %v391
        %635 = vmatpush1.msra.mxu0 %v390
        %636 = vmatprep.subr.mxu0 %v387
        %637 = vmatpush1.msra.mxu0 %v386
        %638 = vmatprep.subr.mxu0 %v383
        %639 = vmatpush1.msra.mxu0 %v382
        %640 = vmatprep.subr.mxu0 %v379
        %641 = vmatpush1.msra.mxu0 %v378
        %642 = vmatprep.subr.mxu0 %v375
        %643 = vmatpush1.msra.mxu0 %v374
        %644 = vmatprep.subr.mxu0 %v371
        %645 = vmatpush1.msra.mxu0 %v370
        %646 = vmatprep.subr.mxu0 %v367
        %647 = vmatpush1.msra.mxu0 %v366
        %648 = vmatprep.subr.mxu0 %v363
        %649 = vmatpush1.msra.mxu0 %v362
        %650 = vmatprep.subr.mxu0 %v487
        %651 = vmatpush2.msra.mxu0 %v486
        %652 = vmatprep.subr.mxu0 %v483
        %653 = vmatpush2.msra.mxu0 %v482
        %654 = vmatprep.subr.mxu0 %v479
        %655 = vmatpush2.msra.mxu0 %v478
        %656 = vmatprep.subr.mxu0 %v475
        %657 = vmatpush2.msra.mxu0 %v474
        %658 = vmatprep.subr.mxu0 %v471
        %659 = vmatpush2.msra.mxu0 %v470
        %660 = vmatprep.subr.mxu0 %v467
        %661 = vmatpush2.msra.mxu0 %v466
        %662 = vmatprep.subr.mxu0 %v463
        %663 = vmatpush2.msra.mxu0 %v462
        %664 = vmatprep.subr.mxu0 %v459
        %665 = vmatpush2.msra.mxu0 %v458
        %666 = vmatprep.subr.mxu0 %v455
        %667 = vmatpush2.msra.mxu0 %v454
        %668 = vmatprep.subr.mxu0 %v451
        %669 = vmatpush2.msra.mxu0 %v450
        %670 = vmatprep.subr.mxu0 %v447
        %671 = vmatpush2.msra.mxu0 %v446
        %672 = vmatprep.subr.mxu0 %v443
        %673 = vmatpush2.msra.mxu0 %v442
        %674 = vmatprep.subr.mxu0 %v439
        %675 = vmatpush2.msra.mxu0 %v438
        %676 = vmatprep.subr.mxu0 %v435
        %677 = vmatpush2.msra.mxu0 %v434
        %678 = vmatprep.subr.mxu0 %v431
        %679 = vmatpush2.msra.mxu0 %v430
        %680 = vmatprep.subr.mxu0 %v427
        %681 = vmatpush2.msra.mxu0 %v426
        %682 = vmatprep.mubr.f32.mxu0 %v355
        %683 = vmatmul.mubr.f32.gmra.mxu0 %v354
        %v684 = vpop.f32.mrf.mxu0
        %v685 = vadd.f32 0.0, %v684
        %v686 = vpop.f32.mrf.mxu0
        %v687 = vadd.f32 0.0, %v686
        %688 = vmatprep.mubr.f32.mxu0 %v359
        %689 = vmatmul.mubr.f32.gmra.mxu0 %v358
        %v690 = vpop.f32.mrf.mxu0
        %v691 = vadd.f32 0.0, %v690
        %v692 = vpop.f32.mrf.mxu0
        %v693 = vadd.f32 0.0, %v692
        %694 = vdwg.mxu0
        %695 = vmatprep.subr.mxu0 %v551
        %696 = vmatpush1.msra.mxu0 %v550
        %697 = vmatprep.subr.mxu0 %v547
        %698 = vmatpush1.msra.mxu0 %v546
        %699 = vmatprep.subr.mxu0 %v543
        %700 = vmatpush1.msra.mxu0 %v542
        %701 = vmatprep.subr.mxu0 %v539
        %702 = vmatpush1.msra.mxu0 %v538
        %703 = vmatprep.subr.mxu0 %v535
        %704 = vmatpush1.msra.mxu0 %v534
        %705 = vmatprep.subr.mxu0 %v531
        %706 = vmatpush1.msra.mxu0 %v530
        %707 = vmatprep.subr.mxu0 %v527
        %708 = vmatpush1.msra.mxu0 %v526
        %709 = vmatprep.subr.mxu0 %v523
        %710 = vmatpush1.msra.mxu0 %v522
        %711 = vmatprep.subr.mxu0 %v519
        %712 = vmatpush1.msra.mxu0 %v518
        %713 = vmatprep.subr.mxu0 %v515
        %714 = vmatpush1.msra.mxu0 %v514
        %715 = vmatprep.subr.mxu0 %v511
        %716 = vmatpush1.msra.mxu0 %v510
        %717 = vmatprep.subr.mxu0 %v507
        %718 = vmatpush1.msra.mxu0 %v506
        %719 = vmatprep.subr.mxu0 %v503
        %720 = vmatpush1.msra.mxu0 %v502
        %721 = vmatprep.subr.mxu0 %v499
        %722 = vmatpush1.msra.mxu0 %v498
        %723 = vmatprep.subr.mxu0 %v495
        %724 = vmatpush1.msra.mxu0 %v494
        %725 = vmatprep.subr.mxu0 %v491
        %726 = vmatpush1.msra.mxu0 %v490
        %727 = vmatprep.subr.mxu0 %v615
        %728 = vmatpush2.msra.mxu0 %v614
        %729 = vmatprep.subr.mxu0 %v611
        %730 = vmatpush2.msra.mxu0 %v610
        %731 = vmatprep.subr.mxu0 %v607
        %732 = vmatpush2.msra.mxu0 %v606
        %733 = vmatprep.subr.mxu0 %v603
        %734 = vmatpush2.msra.mxu0 %v602
        %735 = vmatprep.subr.mxu0 %v599
        %736 = vmatpush2.msra.mxu0 %v598
        %737 = vmatprep.subr.mxu0 %v595
        %738 = vmatpush2.msra.mxu0 %v594
        %739 = vmatprep.subr.mxu0 %v591
        %740 = vmatpush2.msra.mxu0 %v590
        %741 = vmatprep.subr.mxu0 %v587
        %742 = vmatpush2.msra.mxu0 %v586
        %743 = vmatprep.subr.mxu0 %v583
        %744 = vmatpush2.msra.mxu0 %v582
        %745 = vmatprep.subr.mxu0 %v579
        %746 = vmatpush2.msra.mxu0 %v578
        %747 = vmatprep.subr.mxu0 %v575
        %748 = vmatpush2.msra.mxu0 %v574
        %749 = vmatprep.subr.mxu0 %v571
        %750 = vmatpush2.msra.mxu0 %v570
        %751 = vmatprep.subr.mxu0 %v567
        %752 = vmatpush2.msra.mxu0 %v566
        %753 = vmatprep.subr.mxu0 %v563
        %754 = vmatpush2.msra.mxu0 %v562
        %755 = vmatprep.subr.mxu0 %v559
        %756 = vmatpush2.msra.mxu0 %v558
        %757 = vmatprep.subr.mxu0 %v555
        %758 = vmatpush2.msra.mxu0 %v554
        %759 = vmatprep.mubr.f32.mxu0 %v357
        %760 = vmatmul.mubr.f32.gmra.mxu0 %v356
        %v761 = vpop.f32.mrf.mxu0
        %v762 = vadd.f32 %v685, %v761
        %v763 = vpop.f32.mrf.mxu0
        %v764 = vadd.f32 %v687, %v763
        %765 = vmatprep.mubr.f32.mxu0 %v361
        %766 = vmatmul.mubr.f32.gmra.mxu0 %v360
        %v767 = vpop.f32.mrf.mxu0
        %v768 = vadd.f32 %v691, %v767
        %v769 = vpop.f32.mrf.mxu0
        %v770 = vadd.f32 %v693, %v769
        %771 = vdwg.mxu0
        %772 = vmatprep.subr.mxu0 %v425
        %773 = vmatpush1.msra.mxu0 %v424
        %774 = vmatprep.subr.mxu0 %v421
        %775 = vmatpush1.msra.mxu0 %v420
        %776 = vmatprep.subr.mxu0 %v417
        %777 = vmatpush1.msra.mxu0 %v416
        %778 = vmatprep.subr.mxu0 %v413
        %779 = vmatpush1.msra.mxu0 %v412
        %780 = vmatprep.subr.mxu0 %v409
        %781 = vmatpush1.msra.mxu0 %v408
        %782 = vmatprep.subr.mxu0 %v405
        %783 = vmatpush1.msra.mxu0 %v404
        %784 = vmatprep.subr.mxu0 %v401
        %785 = vmatpush1.msra.mxu0 %v400
        %786 = vmatprep.subr.mxu0 %v397
        %787 = vmatpush1.msra.mxu0 %v396
        %788 = vmatprep.subr.mxu0 %v393
        %789 = vmatpush1.msra.mxu0 %v392
        %790 = vmatprep.subr.mxu0 %v389
        %791 = vmatpush1.msra.mxu0 %v388
        %792 = vmatprep.subr.mxu0 %v385
        %793 = vmatpush1.msra.mxu0 %v384
        %794 = vmatprep.subr.mxu0 %v381
        %795 = vmatpush1.msra.mxu0 %v380
        %796 = vmatprep.subr.mxu0 %v377
        %797 = vmatpush1.msra.mxu0 %v376
        %798 = vmatprep.subr.mxu0 %v373
        %799 = vmatpush1.msra.mxu0 %v372
        %800 = vmatprep.subr.mxu0 %v369
        %801 = vmatpush1.msra.mxu0 %v368
        %802 = vmatprep.subr.mxu0 %v365
        %803 = vmatpush1.msra.mxu0 %v364
        %804 = vmatprep.subr.mxu0 %v489
        %805 = vmatpush2.msra.mxu0 %v488
        %806 = vmatprep.subr.mxu0 %v485
        %807 = vmatpush2.msra.mxu0 %v484
        %808 = vmatprep.subr.mxu0 %v481
        %809 = vmatpush2.msra.mxu0 %v480
        %810 = vmatprep.subr.mxu0 %v477
        %811 = vmatpush2.msra.mxu0 %v476
        %812 = vmatprep.subr.mxu0 %v473
        %813 = vmatpush2.msra.mxu0 %v472
        %814 = vmatprep.subr.mxu0 %v469
        %815 = vmatpush2.msra.mxu0 %v468
        %816 = vmatprep.subr.mxu0 %v465
        %817 = vmatpush2.msra.mxu0 %v464
        %818 = vmatprep.subr.mxu0 %v461
        %819 = vmatpush2.msra.mxu0 %v460
        %820 = vmatprep.subr.mxu0 %v457
        %821 = vmatpush2.msra.mxu0 %v456
        %822 = vmatprep.subr.mxu0 %v453
        %823 = vmatpush2.msra.mxu0 %v452
        %824 = vmatprep.subr.mxu0 %v449
        %825 = vmatpush2.msra.mxu0 %v448
        %826 = vmatprep.subr.mxu0 %v445
        %827 = vmatpush2.msra.mxu0 %v444
        %828 = vmatprep.subr.mxu0 %v441
        %829 = vmatpush2.msra.mxu0 %v440
        %830 = vmatprep.subr.mxu0 %v437
        %831 = vmatpush2.msra.mxu0 %v436
        %832 = vmatprep.subr.mxu0 %v433
        %833 = vmatpush2.msra.mxu0 %v432
        %834 = vmatprep.subr.mxu0 %v429
        %835 = vmatpush2.msra.mxu0 %v428
        %836 = vmatprep.mubr.f32.mxu0 %v355
        %837 = vmatmul.mubr.f32.gmra.mxu0 %v354
        %v838 = vpop.f32.mrf.mxu0
        %v839 = vadd.f32 0.0, %v838
        %v840 = vpop.f32.mrf.mxu0
        %v841 = vadd.f32 0.0, %v840
        %842 = vmatprep.mubr.f32.mxu0 %v359
        %843 = vmatmul.mubr.f32.gmra.mxu0 %v358
        %v844 = vpop.f32.mrf.mxu0
        %v845 = vadd.f32 0.0, %v844
        %v846 = vpop.f32.mrf.mxu0
        %v847 = vadd.f32 0.0, %v846
        %848 = vdwg.mxu0
        %849 = vmatprep.subr.mxu0 %v553
        %850 = vmatpush1.msra.mxu0 %v552
        %851 = vmatprep.subr.mxu0 %v549
        %852 = vmatpush1.msra.mxu0 %v548
        %853 = vmatprep.subr.mxu0 %v545
        %854 = vmatpush1.msra.mxu0 %v544
        %855 = vmatprep.subr.mxu0 %v541
        %856 = vmatpush1.msra.mxu0 %v540
        %857 = vmatprep.subr.mxu0 %v537
        %858 = vmatpush1.msra.mxu0 %v536
        %859 = vmatprep.subr.mxu0 %v533
        %860 = vmatpush1.msra.mxu0 %v532
        %861 = vmatprep.subr.mxu0 %v529
        %862 = vmatpush1.msra.mxu0 %v528
        %863 = vmatprep.subr.mxu0 %v525
        %864 = vmatpush1.msra.mxu0 %v524
        %865 = vmatprep.subr.mxu0 %v521
        %866 = vmatpush1.msra.mxu0 %v520
        %867 = vmatprep.subr.mxu0 %v517
        %868 = vmatpush1.msra.mxu0 %v516
        %869 = vmatprep.subr.mxu0 %v513
        %870 = vmatpush1.msra.mxu0 %v512
        %871 = vmatprep.subr.mxu0 %v509
        %872 = vmatpush1.msra.mxu0 %v508
        %873 = vmatprep.subr.mxu0 %v505
        %874 = vmatpush1.msra.mxu0 %v504
        %875 = vmatprep.subr.mxu0 %v501
        %876 = vmatpush1.msra.mxu0 %v500
        %877 = vmatprep.subr.mxu0 %v497
        %878 = vmatpush1.msra.mxu0 %v496
        %879 = vmatprep.subr.mxu0 %v493
        %880 = vmatpush1.msra.mxu0 %v492
        %881 = vmatprep.subr.mxu0 %v617
        %882 = vmatpush2.msra.mxu0 %v616
        %883 = vmatprep.subr.mxu0 %v613
        %884 = vmatpush2.msra.mxu0 %v612
        %885 = vmatprep.subr.mxu0 %v609
        %886 = vmatpush2.msra.mxu0 %v608
        %887 = vmatprep.subr.mxu0 %v605
        %888 = vmatpush2.msra.mxu0 %v604
        %889 = vmatprep.subr.mxu0 %v601
        %890 = vmatpush2.msra.mxu0 %v600
        %891 = vmatprep.subr.mxu0 %v597
        %892 = vmatpush2.msra.mxu0 %v596
        %893 = vmatprep.subr.mxu0 %v593
        %894 = vmatpush2.msra.mxu0 %v592
        %895 = vmatprep.subr.mxu0 %v589
        %896 = vmatpush2.msra.mxu0 %v588
        %897 = vmatprep.subr.mxu0 %v585
        %898 = vmatpush2.msra.mxu0 %v584
        %899 = vmatprep.subr.mxu0 %v581
        %900 = vmatpush2.msra.mxu0 %v580
        %901 = vmatprep.subr.mxu0 %v577
        %902 = vmatpush2.msra.mxu0 %v576
        %903 = vmatprep.subr.mxu0 %v573
        %904 = vmatpush2.msra.mxu0 %v572
        %905 = vmatprep.subr.mxu0 %v569
        %906 = vmatpush2.msra.mxu0 %v568
        %907 = vmatprep.subr.mxu0 %v565
        %908 = vmatpush2.msra.mxu0 %v564
        %909 = vmatprep.subr.mxu0 %v561
        %910 = vmatpush2.msra.mxu0 %v560
        %911 = vmatprep.subr.mxu0 %v557
        %912 = vmatpush2.msra.mxu0 %v556
        %913 = vmatprep.mubr.f32.mxu0 %v357
        %914 = vmatmul.mubr.f32.gmra.mxu0 %v356
        %v915 = vpop.f32.mrf.mxu0
        %v916 = vadd.f32 %v839, %v915
        %v917 = vpop.f32.mrf.mxu0
        %v918 = vadd.f32 %v841, %v917
        %919 = vmatprep.mubr.f32.mxu0 %v361
        %920 = vmatmul.mubr.f32.gmra.mxu0 %v360
        %v921 = vpop.f32.mrf.mxu0
        %v922 = vadd.f32 %v845, %v921
        %v923 = vpop.f32.mrf.mxu0
        %v924 = vadd.f32 %v847, %v923
        %925 = vdwg.mxu0
        %v926 = vadd.f32 %v346, %v762
        %v927 = vadd.f32 %v347, %v764
        %v928 = vadd.f32 %v348, %v916
        %v929 = vadd.f32 %v349, %v918
        %v930 = vadd.f32 %v350, %v768
        %v931 = vadd.f32 %v351, %v770
        %v932 = vadd.f32 %v352, %v922
        %v933 = vadd.f32 %v353, %v924
        %934 = vst [vmem:[#allocation2] sm:$0xff] %v926
        %935 = vst [vmem:[#allocation2 + $0x8] sm:$0xff] %v927
        %936 = vst [vmem:[#allocation2 + $0x10] sm:$0xff] %v928
        %937 = vst [vmem:[#allocation2 + $0x18] sm:$0xff] %v929
        %938 = vst [vmem:[#allocation2 + $0x20] sm:$0xff] %v930
        %939 = vst [vmem:[#allocation2 + $0x28] sm:$0xff] %v931
        %940 = vst [vmem:[#allocation2 + $0x30] sm:$0xff] %v932
        %941 = vst [vmem:[#allocation2 + $0x38] sm:$0xff] %v933
        %p942 = scmp.eq.s32.totalorder %s30, 1
        // Predicated region
        $region61: #{tpu_custom_call.1} parent=39 // pred_check
          %p943 = pneg %p942
        $region62: #{tpu_custom_call.1} parent=39 // pred_check_branch
          %945 = sbr.rel (%p943) target = $region64
        $region63: #{tpu_custom_call.1} parent=39 // pred_region
          %v946 = vld [vmem:[#allocation2] sm:$0xff]
          %v947 = vld [vmem:[#allocation2 + $0x8] sm:$0xff]
          %v948 = vld [vmem:[#allocation2 + $0x10] sm:$0xff]
          %v949 = vld [vmem:[#allocation2 + $0x18] sm:$0xff]
          %v950 = vld [vmem:[#allocation2 + $0x20] sm:$0xff]
          %v951 = vld [vmem:[#allocation2 + $0x28] sm:$0xff]
          %v952 = vld [vmem:[#allocation2 + $0x30] sm:$0xff]
          %v953 = vld [vmem:[#allocation2 + $0x38] sm:$0xff]
          %v954 = vld [vmem:[#allocation8] sm:$0xf]
          %v956 = vlaneseq
          %v957 = vshrl.u32 %v956, 7
          %v958 = vsub.s32 0, %v957
          %v959 = vrot.slane %v954, %v958
          %v960 = vlaneseq
          %v961 = vshrl.u32 %v960, 7
          %v962 = vsub.s32 1, %v961
          %v963 = vrot.slane %v954, %v962
          %v964 = vlaneseq
          %v965 = vshrl.u32 %v964, 7
          %v966 = vsub.s32 2, %v965
          %v967 = vrot.slane %v954, %v966
          %v968 = vlaneseq
          %v969 = vshrl.u32 %v968, 7
          %v970 = vsub.s32 3, %v969
          %v971 = vrot.slane %v954, %v970
          %v976 = vadd.f32 %v946, %v959
          %v977 = vadd.f32 %v947, %v963
          %v978 = vadd.f32 %v948, %v967
          %v979 = vadd.f32 %v949, %v971
          %v980 = vadd.f32 %v950, %v959
          %v981 = vadd.f32 %v951, %v963
          %v982 = vadd.f32 %v952, %v967
          %v983 = vadd.f32 %v953, %v971
          %v984 = vmax.f32 %v976, 0.0
          %v985 = vmax.f32 %v977, 0.0
          %v986 = vmax.f32 %v978, 0.0
          %v987 = vmax.f32 %v979, 0.0
          %v988 = vmax.f32 %v980, 0.0
          %v989 = vmax.f32 %v981, 0.0
          %v990 = vmax.f32 %v982, 0.0
          %v991 = vmax.f32 %v983, 0.0
          %v992 = vld [vmem:[#allocation9] sm:$0xf]
          %v994 = vlaneseq
          %v995 = vshrl.u32 %v994, 7
          %v996 = vsub.s32 0, %v995
          %v997 = vrot.slane %v992, %v996
          %v998 = vlaneseq
          %v999 = vshrl.u32 %v998, 7
          %v1000 = vsub.s32 1, %v999
          %v1001 = vrot.slane %v992, %v1000
          %v1002 = vlaneseq
          %v1003 = vshrl.u32 %v1002, 7
          %v1004 = vsub.s32 2, %v1003
          %v1005 = vrot.slane %v992, %v1004
          %v1006 = vlaneseq
          %v1007 = vshrl.u32 %v1006, 7
          %v1008 = vsub.s32 3, %v1007
          %v1009 = vrot.slane %v992, %v1008
          %v1014 = vmul.f32 %v984, %v997
          %v1015 = vmul.f32 %v985, %v1001
          %v1016 = vmul.f32 %v986, %v1005
          %v1017 = vmul.f32 %v987, %v1009
          %v1018 = vmul.f32 %v988, %v997
          %v1019 = vmul.f32 %v989, %v1001
          %v1020 = vmul.f32 %v990, %v1005
          %v1021 = vmul.f32 %v991, %v1009
          %v1022 = vadd.f32 %v1014, %v1015
          %v1023 = vadd.f32 %v1022, %v1016
          %v1024 = vadd.f32 %v1023, %v1017
          %1025 = vadd.xlane.f32.xlu0 %v1024
          %v1026 = vpop.xlane.xlu0 %1025
          %v1027 = vadd.f32 %v1018, %v1019
          %v1028 = vadd.f32 %v1027, %v1020
          %v1029 = vadd.f32 %v1028, %v1021
          %1030 = vadd.xlane.f32.xlu0 %v1029
          %v1031 = vpop.xlane.xlu0 %1030
          %v1032 = vld [vmem:[#allocation3] sm:$0x1]
          %v1034 = vlaneseq
          %v1035 = vshrl.u32 %v1034, 7
          %v1036 = vsub.s32 0, %v1035
          %v1037 = vrot.slane %v1032, %v1036
          %v1039 = vadd.f32 %v1026, %v1037
          %v1040 = vadd.f32 %v1031, %v1037
          %vm1041 = vcmask 7168
          %1042 = vst.msk [vmem:[%s332] sm:$0xff] %vm1041, %v1039
          %1043 = vst.msk [vmem:[%s332 + $0x8] sm:$0xff] %vm1041, %v1040
        $region64: #{tpu_custom_call.1} parent=39 // pred_fallthru
          _
        %s1044 = smul.u32 2, %s29
        %p1045 = scmp.lt.s32.totalorder %s1044, 1
        %s1046 = scalar_select %p1045, %s1044, 1
        %s1047 = smul.addr %s1046, 8
        %s1048 = scalar_lea.vmem %s5, %s1047
        // Predicated region
        $region65: #{tpu_custom_call.1} parent=39 // pred_check
          %p1049 = pneg %p172
        $region66: #{tpu_custom_call.1} parent=39 // pred_check_branch
          %1051 = sbr.rel (%p1049) target = $region68
        $region67: #{tpu_custom_call.1} parent=39 // pred_region
          %s1052 = smul.u32 2, %s29
        $region68: #{tpu_custom_call.1} parent=39 // pred_fallthru
          _
        // Predicated region
        $region69: #{tpu_custom_call.1} parent=39 // pred_check
          %p1053 = pneg %p172
        $region70: #{tpu_custom_call.1} parent=39 // pred_check_branch
          %1055 = sbr.rel (%p1053) target = $region72
        $region71: #{tpu_custom_call.1} parent=39 // pred_region
          %s1056 = smul.u32 2, %s29
          %p1057 = scmp.lt.s32.totalorder %s1056, 1
          %s1058 = scalar_select %p1057, %s1056, 1
          %s1059 = smul.addr %s1058, 8
          %s1060 = scalar_lea.vmem %s5, %s1059
        $region72: #{tpu_custom_call.1} parent=39 // pred_fallthru
          _
      $region40: #{tpu_custom_call.1} parent=5 // pred_fallthru
        _
      %p1061 = scmp.le.s32.totalorder 2, %s20
      // Predicated region
      $region73: #{tpu_custom_call.1} parent=5 // pred_check
        %p1062 = pneg %p1061
      $region74: #{tpu_custom_call.1} parent=5 // pred_check_branch
        %1064 = sbr.rel (%p1062) target = $region76
      $region75: #{tpu_custom_call.1} parent=5 // pred_region
        %s1065 = ssub.s32 %s20, 2
      $region76: #{tpu_custom_call.1} parent=5 // pred_fallthru
        _
    $region6: #{tpu_custom_call.1} parent=1 // loop_footer
      %s24 = sadd.s32 1, %s20
    $region7: #{tpu_custom_call.1} parent=1 // loop_footer_branch
      %19 = sbr.rel target = $region3
    $region8: #{tpu_custom_call.1} parent=1 // loop_exit
      _
    %1066 = vsyncpa [#allocation5], 1
    %s1067 = scalar_lea.sflag [#allocation5], 1
    %1068 = vsyncpa %s1067, 1
    %1069 = vsyncpa [#allocation7], 1
    %s1070 = scalar_lea.sflag [#allocation7], 1
    %1071 = vsyncpa %s1070, 1
    %1072 = vsyncpa [#allocation10], 1

</llo_original>
